<compile_context>
chip_gen: v6e
topology: v6e:2x2x1
jax: 0.10.0
libtpu: 0.0.40
codegen_flags: <defaults>
</compile_context>

<pallas_src>
import math

import jax
import jax.numpy as jnp
from jax.experimental import pallas as pl
from jax.experimental.pallas import tpu as pltpu


def residual_critic_kernel(x_ref, w_ref, p_ref, o_ref):
    x = x_ref[...]                      # (bt, F) activations for this batch tile
    w1 = w_ref[0]                       # (F, F)  resident across all grid steps
    w2 = w_ref[1]                       # (F, F)
    b1 = p_ref[0:1, :]                  # (1, F)
    b2 = p_ref[1:2, :]                  # (1, F)
    w3 = p_ref[2:3, :]                  # (1, F)  output head stored as a row
    b3 = p_ref[3:4, 0:1]                # (1, 1)

    h1 = jnp.maximum(jnp.dot(x, w1, preferred_element_type=jnp.float32) + b1, 0.0)
    h2 = jnp.dot(h1, w2, preferred_element_type=jnp.float32) + b2
    h = jnp.maximum(h2 + x, 0.0)        # residual + relu

    # Head: q[j] = sum_f h[j, f] * w3[f] + b3, produced directly as a (1, bt) row
    # so the per-tile store is lane-dense.
    q = jax.lax.dot_general(w3, h, (((1,), (1,)), ((), ())),
                            preferred_element_type=jnp.float32) + b3
    o_ref[...] = q                      # (1, bt)


def _round_up(n, m):
    return ((n + m - 1) // m) * m


def pack_params(params):
    """Pack the 6 linear params into 2 arrays (cuts pallas_call inputs 7 -> 3)."""
    w1, b1, w2, b2, w3, b3 = params
    f = w1.shape[0]
    assert w1.shape == (f, f) and w2.shape == (f, f), \
        "residual add requires n_input == n_features"
    assert w3.shape == (f, 1), "packed head assumes n_output == 1 (critic)"
    w_pack = jnp.stack([w1, w2], axis=0).astype(jnp.float32)      # (2, F, F)
    p_pack = jnp.zeros((4, f), jnp.float32)
    p_pack = p_pack.at[0].set(jnp.reshape(b1, (f,)))
    p_pack = p_pack.at[1].set(jnp.reshape(b2, (f,)))
    p_pack = p_pack.at[2].set(jnp.reshape(w3, (f,)))
    p_pack = p_pack.at[3, 0].set(jnp.reshape(b3, ()))
    return w_pack, p_pack


def residual_critic_forward(x, params, *, batch_tile=256):
    """x: (batch, n_input) float32. Returns squeezed q, matching torch.squeeze."""
    batch, n_in = x.shape
    w_pack, p_pack = pack_params(params)
    n_feat = w_pack.shape[-1]
    assert n_in == n_feat, "residual add requires n_input == n_features"

    # Batch tiling: pad the batch up to a multiple of the tile (multiples of 8 rows).
    bt = min(batch_tile, _round_up(batch, 8))
    padded = _round_up(batch, bt)
    if padded != batch:
        x = jnp.pad(x, ((0, padded - batch), (0, 0)))
    num_tiles = padded // bt

    q_row = pl.pallas_call(
        residual_critic_kernel,
        out_shape=jax.ShapeDtypeStruct((1, padded), jnp.float32),
        grid=(num_tiles,),
        in_specs=[
            pl.BlockSpec((bt, n_feat), lambda i: (i, 0)),            # x: advances with i
            pl.BlockSpec((2, n_feat, n_feat), lambda i: (0, 0, 0)),  # weights: VMEM-resident
            pl.BlockSpec((4, n_feat), lambda i: (0, 0)),             # biases + head row: resident
        ],
        out_specs=pl.BlockSpec((1, bt), lambda i: (0, i)),           # lane-dense q row
        compiler_params=pltpu.CompilerParams(
            dimension_semantics=("parallel",)),
    )(x, w_pack, p_pack)

    # torch.squeeze removes all size-1 dims (n_output == 1 -> (batch,); also drops
    # the batch dim if batch == 1).
    return jnp.squeeze(q_row[0, :batch])


def init_params(key, n_input, n_features, n_output):
    """Deterministic init mirroring the PyTorch module's __init__."""
    def xavier_uniform(k, fan_in, fan_out, gain):
        bound = gain * math.sqrt(6.0 / (fan_in + fan_out))
        # PyTorch weight shape is (out, in); sample in that shape then transpose.
        w = jax.random.uniform(k, (fan_out, fan_in), jnp.float32, -bound, bound)
        return w.T  # kernel expects (in, out)

    def bias_init(k, fan_in, fan_out):
        bound = 1.0 / math.sqrt(fan_in)
        return jax.random.uniform(k, (1, fan_out), jnp.float32, -bound, bound)

    ks = jax.random.split(key, 6)
    gain_relu = math.sqrt(2.0)
    gain_lin = 1.0
    w1 = xavier_uniform(ks[0], n_input, n_features, gain_relu)
    b1 = bias_init(ks[1], n_input, n_features)
    w2 = xavier_uniform(ks[2], n_features, n_features, gain_relu)
    b2 = bias_init(ks[3], n_features, n_features)
    w3 = xavier_uniform(ks[4], n_features, n_output, gain_lin)
    b3 = bias_init(ks[5], n_features, n_output)
    return (w1, b1, w2, b2, w3, b3)


if __name__ == "__main__":
    # Residual add requires n_input == n_features (as in the PyTorch module's usage).
    # Use an RL-realistic batch so the batch grid actually amortizes per-step overhead.
    batch, n_input, n_features, n_output = 1024, 32, 32, 1

    key = jax.random.PRNGKey(0)
    k_x, k_p = jax.random.split(key)
    x = jax.random.normal(k_x, (batch, n_input), dtype=jnp.float32)
    params = init_params(k_p, n_input, n_features, n_output)

    fwd = jax.jit(residual_critic_forward)
    q = jax.block_until_ready(fwd(x, params))

    # Pure-JAX reference check
    w1, b1, w2, b2, w3, b3 = params
    h1 = jax.nn.relu(x @ w1 + b1)
    h = jax.nn.relu(h1 @ w2 + b2 + x)
    q_ref = jnp.squeeze(h @ w3 + b3)
    assert q.shape == (batch,), q.shape
    assert jnp.allclose(q, q_ref, atol=1e-4, rtol=1e-4), \
        float(jnp.max(jnp.abs(q - q_ref)))

    # Exercise the non-tile-divisible (padded) batch path as well.
    q_small = jax.block_until_ready(residual_critic_forward(x[:200], params))
    assert q_small.shape == (200,)
    assert jnp.allclose(q_small, q_ref[:200], atol=1e-4, rtol=1e-4)

    print("KERNEL_OK")
</pallas_src>

<mosaic_0001>
module attributes {stable_mosaic.version = 11 : i64} {
  func.func @residual_critic_kernel(%arg0: i32, %arg1: memref<256x32xf32, #tpu.memory_space<vmem>>, %arg2: memref<2x32x32xf32, #tpu.memory_space<vmem>>, %arg3: memref<4x32xf32, #tpu.memory_space<vmem>>, %arg4: memref<1x256xf32, #tpu.memory_space<vmem>>) attributes {dimension_semantics = [#tpu.dimension_semantics<parallel>], iteration_bounds = array<i64: 4>, scalar_prefetch = 0 : i64, scratch_operands = 0 : i64, tpu.core_type = #tpu.core_type<tc>, window_params = [{transform_indices = @transform_0, window_bounds = array<i64: 256, 32>}, {pipeline_mode = #tpu.pipeline_mode<synchronous>, transform_indices = @transform_1, window_bounds = array<i64: 2, 32, 32>}, {pipeline_mode = #tpu.pipeline_mode<synchronous>, transform_indices = @transform_2, window_bounds = array<i64: 4, 32>}, {transform_indices = @transform_3, window_bounds = array<i64: 1, 256>}]} {
    %c0 = arith.constant 0 : index
    %c0_0 = arith.constant 0 : index
    %0 = vector.load %arg1[%c0, %c0_0] : memref<256x32xf32, #tpu.memory_space<vmem>>, vector<256x32xf32>
    %c0_1 = arith.constant 0 : index
    %c0_2 = arith.constant 0 : index
    %c0_3 = arith.constant 0 : index
    %1 = vector.load %arg2[%c0_1, %c0_2, %c0_3] : memref<2x32x32xf32, #tpu.memory_space<vmem>>, vector<1x32x32xf32>
    %2 = vector.shape_cast %1 : vector<1x32x32xf32> to vector<32x32xf32>
    %c1 = arith.constant 1 : index
    %c0_4 = arith.constant 0 : index
    %c0_5 = arith.constant 0 : index
    %3 = vector.load %arg2[%c1, %c0_4, %c0_5] : memref<2x32x32xf32, #tpu.memory_space<vmem>>, vector<1x32x32xf32>
    %4 = vector.shape_cast %3 : vector<1x32x32xf32> to vector<32x32xf32>
    %c0_6 = arith.constant 0 : index
    %c0_7 = arith.constant 0 : index
    %5 = vector.load %arg3[%c0_6, %c0_7] : memref<4x32xf32, #tpu.memory_space<vmem>>, vector<1x32xf32>
    %c1_8 = arith.constant 1 : index
    %c0_9 = arith.constant 0 : index
    %6 = vector.load %arg3[%c1_8, %c0_9] : memref<4x32xf32, #tpu.memory_space<vmem>>, vector<1x32xf32>
    %c2 = arith.constant 2 : index
    %c0_10 = arith.constant 0 : index
    %7 = vector.load %arg3[%c2, %c0_10] : memref<4x32xf32, #tpu.memory_space<vmem>>, vector<1x32xf32>
    %c3 = arith.constant 3 : index
    %c0_11 = arith.constant 0 : index
    %8 = vector.load %arg3[%c3, %c0_11] : memref<4x32xf32, #tpu.memory_space<vmem>>, vector<1x1xf32>
    %cst = arith.constant dense<0.000000e+00> : vector<256x32xf32>
    %9 = tpu.matmul %0, %2, %cst {dimension_numbers = #tpu.dot_dimension_numbers<[1], [0], [0], [1], [0, 0, 1, 1], [], []>} : vector<256x32xf32>, vector<32x32xf32>, vector<256x32xf32> -> vector<256x32xf32>
    %10 = vector.broadcast %5 : vector<1x32xf32> to vector<256x32xf32>
    %11 = arith.addf %9, %10 : vector<256x32xf32>
    %cst_12 = arith.constant 0.000000e+00 : f32
    %12 = vector.broadcast %cst_12 : f32 to vector<256x32xf32>
    %13 = arith.maximumf %11, %12 : vector<256x32xf32>
    %cst_13 = arith.constant dense<0.000000e+00> : vector<256x32xf32>
    %14 = tpu.matmul %13, %4, %cst_13 {dimension_numbers = #tpu.dot_dimension_numbers<[1], [0], [0], [1], [0, 0, 1, 1], [], []>} : vector<256x32xf32>, vector<32x32xf32>, vector<256x32xf32> -> vector<256x32xf32>
    %15 = vector.broadcast %6 : vector<1x32xf32> to vector<256x32xf32>
    %16 = arith.addf %14, %15 : vector<256x32xf32>
    %17 = arith.addf %16, %0 : vector<256x32xf32>
    %cst_14 = arith.constant 0.000000e+00 : f32
    %18 = vector.broadcast %cst_14 : f32 to vector<256x32xf32>
    %19 = arith.maximumf %17, %18 : vector<256x32xf32>
    %cst_15 = arith.constant dense<0.000000e+00> : vector<1x256xf32>
    %20 = tpu.matmul %7, %19, %cst_15 {dimension_numbers = #tpu.dot_dimension_numbers<[1], [1], [0], [0], [0, 0, 1, 0], [], []>} : vector<1x32xf32>, vector<256x32xf32>, vector<1x256xf32> -> vector<1x256xf32>
    %21 = vector.broadcast %8 : vector<1x1xf32> to vector<1x256xf32>
    %22 = arith.addf %20, %21 : vector<1x256xf32>
    %c0_16 = arith.constant 0 : index
    %c0_17 = arith.constant 0 : index
    %23 = vector.load %arg4[%c0_16, %c0_17] : memref<1x256xf32, #tpu.memory_space<vmem>>, vector<1x256xf32>
    tpu.vector_store %arg4[%c0_16, %c0_17], %22 {strides = array<i32>} : memref<1x256xf32, #tpu.memory_space<vmem>>, vector<1x256xf32>,
    return
  }
  func.func @transform_0(%arg0: i32) -> (i32, i32) {
    %c0_i32 = arith.constant 0 : i32
    %c0_i32_0 = arith.constant 0 : i32
    return %arg0, %c0_i32 : i32, i32
  }
  func.func @transform_1(%arg0: i32) -> (i32, i32, i32) {
    %c0_i32 = arith.constant 0 : i32
    %c0_i32_0 = arith.constant 0 : i32
    %c0_i32_1 = arith.constant 0 : i32
    %c0_i32_2 = arith.constant 0 : i32
    return %c0_i32, %c0_i32_0, %c0_i32_1 : i32, i32, i32
  }
  func.func @transform_2(%arg0: i32) -> (i32, i32) {
    %c0_i32 = arith.constant 0 : i32
    %c0_i32_0 = arith.constant 0 : i32
    %c0_i32_1 = arith.constant 0 : i32
    return %c0_i32, %c0_i32_0 : i32, i32
  }
  func.func @transform_3(%arg0: i32) -> (i32, i32) {
    %c0_i32 = arith.constant 0 : i32
    %c0_i32_0 = arith.constant 0 : i32
    return %c0_i32, %arg0 : i32, i32
  }
}

</mosaic_0001>

<llo_original>
// kernel: residual_critic_forward.1
$region0: #{residual_critic_forward.1}
  #allocation0 [shape = 'u32[]', space=smem, size = 0x4, offset = 0x4, fixed_abs, tag = 'smem constant byte address 0x4 - core index']
  #allocation1 [shape = 'u32[144,128]{1,0:T(1,128)}', space=vmem, size = 0x12000, scoped, tag = 'internal scratch']
  %s0 = inlined_call_operand.vmem [shape: f32[1024,32], index: 0, kind: input, shape index: {}]
  %s1 = inlined_call_operand.vmem [shape: f32[2,32,32], index: 1, kind: input, shape index: {}]
  %s2 = inlined_call_operand.vmem [shape: f32[4,32], index: 2, kind: input, shape index: {}]
  %s3 = inlined_call_operand.hbm [shape: f32[1,1024], index: 3, kind: output, shape index: {}]
  %s4 = sld [smem:[#allocation0]]
  $region45: #{residual_critic_forward.1} parent=0
    _
  %s6 = ssub.s32 1, %s4
  %s7 = scalar_select 0, %s6, %s4
  $region1: #{residual_critic_forward.1} parent=0
    #allocation2 [shape = 'u8[2048]{0}', space=vmem, size = 0x800, scoped, tag = 'output window, operand 0']
    #allocation3 [shape = 's32[2]{0}', space=sflag, size = 0x8, scoped, tag = 'scoped memory for residual_critic_forward.1']
    %8 = vsyncpa [#allocation3], 0
    %s9 = scalar_lea.sflag [#allocation3], 1
    %10 = vsyncpa %s9, 0
    loop: start=0, step=1, limit=6
    $region2: #{residual_critic_forward.1} parent=1 // loop_pre_header
      _
    $region3: #{residual_critic_forward.1} parent=1 // loop_header
      %s12 = sphi 0, %s16
      %p13 = scmp.ge.s32.totalorder %s12, 6
      %s22 = sphi 0, %s24
      %s25 = sphi 0, %s22
      %s26 = sphi 0, %s25
      %s42 = sphi 0, %s26
      %s46 = sphi 0, %s46
      %s48 = sphi 0, %s46
      %s49 = sphi 0, %s48
      %s63 = sphi 0, %s49
      %s67 = sphi 0, %s67
      %s69 = sphi 0, %s67
      %s70 = sphi 0, %s69
      %s84 = sphi 0, %s70
      %s90 = sphi 0, %s92
      %s93 = sphi 0, %s90
      %s94 = sphi 0, %s93
      %s110 = sphi 0, %s94
    $region4: #{residual_critic_forward.1} parent=1 // loop_header_branch
      %15 = sbr.rel (%p13) target = $region8
    $region5: #{residual_critic_forward.1} parent=1 // loop_body
      %s17 = ssub.s32 %s12, 1
      %s18 = ssub.s32 %s12, 2
      %s19 = sadd.s32 %s12, 1
      %s20 = ssub.s32 %s12, %s19
      %p21 = scmp.eq.s32.totalorder %s20, 0
      %s23 = sadd.s32 %s22, 1
      %s24 = scalar_select %p21, %s22, %s23
      %p27 = pneg %p21
      %p28 = scmp.eq.s32.totalorder %s12, 3
      %p29 = por %p27, %p28
      %p30 = scmp.ne.s32.totalorder %s22, %s25
      %p31 = scmp.eq.s32.totalorder %s12, 0
      %p32 = por %p30, %p31
      %p33 = scmp.ne.s32.totalorder %s22, %s25
      %p34 = scmp.eq.s32.totalorder %s17, 3
      %p35 = por %p33, %p34
      %p36 = scmp.ne.s32.totalorder %s25, %s26
      %p37 = scmp.eq.s32.totalorder %s17, 0
      %p38 = por %p36, %p37
      %p39 = scmp.ne.s32.totalorder %s25, %s26
      %p40 = scmp.eq.s32.totalorder %s18, 3
      %p41 = por %p39, %p40
      %p43 = scmp.ne.s32.totalorder %s26, %s42
      %p44 = scmp.eq.s32.totalorder %s18, 0
      %p45 = por %p43, %p44
      %s47 = sadd.s32 %s46, 1
      %p50 = scmp.eq.s32.totalorder %s12, 3
      %p51 = scmp.ne.s32.totalorder %s46, %s48
      %p52 = scmp.eq.s32.totalorder %s12, 0
      %p53 = por %p51, %p52
      %p54 = scmp.ne.s32.totalorder %s46, %s48
      %p55 = scmp.eq.s32.totalorder %s17, 3
      %p56 = por %p54, %p55
      %p57 = scmp.ne.s32.totalorder %s48, %s49
      %p58 = scmp.eq.s32.totalorder %s17, 0
      %p59 = por %p57, %p58
      %p60 = scmp.ne.s32.totalorder %s48, %s49
      %p61 = scmp.eq.s32.totalorder %s18, 3
      %p62 = por %p60, %p61
      %p64 = scmp.ne.s32.totalorder %s49, %s63
      %p65 = scmp.eq.s32.totalorder %s18, 0
      %p66 = por %p64, %p65
      %s68 = sadd.s32 %s67, 1
      %p71 = scmp.eq.s32.totalorder %s12, 3
      %p72 = scmp.ne.s32.totalorder %s67, %s69
      %p73 = scmp.eq.s32.totalorder %s12, 0
      %p74 = por %p72, %p73
      %p75 = scmp.ne.s32.totalorder %s67, %s69
      %p76 = scmp.eq.s32.totalorder %s17, 3
      %p77 = por %p75, %p76
      %p78 = scmp.ne.s32.totalorder %s69, %s70
      %p79 = scmp.eq.s32.totalorder %s17, 0
      %p80 = por %p78, %p79
      %p81 = scmp.ne.s32.totalorder %s69, %s70
      %p82 = scmp.eq.s32.totalorder %s18, 3
      %p83 = por %p81, %p82
      %p85 = scmp.ne.s32.totalorder %s70, %s84
      %p86 = scmp.eq.s32.totalorder %s18, 0
      %p87 = por %p85, %p86
      %s88 = ssub.s32 %s12, %s19
      %p89 = scmp.eq.s32.totalorder %s88, 0
      %s91 = sadd.s32 %s90, 1
      %s92 = scalar_select %p89, %s90, %s91
      %p95 = pneg %p89
      %p96 = scmp.eq.s32.totalorder %s12, 3
      %p97 = por %p95, %p96
      %p98 = scmp.ne.s32.totalorder %s90, %s93
      %p99 = scmp.eq.s32.totalorder %s12, 0
      %p100 = por %p98, %p99
      %p101 = scmp.ne.s32.totalorder %s90, %s93
      %p102 = scmp.eq.s32.totalorder %s17, 3
      %p103 = por %p101, %p102
      %p104 = scmp.ne.s32.totalorder %s93, %s94
      %p105 = scmp.eq.s32.totalorder %s17, 0
      %p106 = por %p104, %p105
      %p107 = scmp.ne.s32.totalorder %s93, %s94
      %p108 = scmp.eq.s32.totalorder %s18, 3
      %p109 = por %p107, %p108
      %p111 = scmp.ne.s32.totalorder %s94, %s110
      %p112 = scmp.eq.s32.totalorder %s18, 0
      %p113 = por %p111, %p112
      %p114 = scmp.le.s32.totalorder 1, %s12
      %p115 = scmp.lt.s32.totalorder %s12, 5
      %p116 = pnand %p114, %p115
      %p117 = pneg %p116
      // Predicated region
      $region9: #{residual_critic_forward.1} parent=5 // pred_check
        _
      $region10: #{residual_critic_forward.1} parent=5 // pred_check_branch
        %119 = sbr.rel (%p116) target = $region12
      $region11: #{residual_critic_forward.1} parent=5 // pred_region
        %s120 = ssub.s32 %s12, 1
        // Predicated region
        $region13: #{residual_critic_forward.1} parent=11 // pred_check
          %p121 = pneg %p59
        $region14: #{residual_critic_forward.1} parent=11 // pred_check_branch
          %123 = sbr.rel (%p121) target = $region16
        $region15: #{residual_critic_forward.1} parent=11 // pred_region
          _
        $region16: #{residual_critic_forward.1} parent=11 // pred_fallthru
          _
        // Predicated region
        $region17: #{residual_critic_forward.1} parent=11 // pred_check
          %p124 = pneg %p80
        $region18: #{residual_critic_forward.1} parent=11 // pred_check_branch
          %126 = sbr.rel (%p124) target = $region20
        $region19: #{residual_critic_forward.1} parent=11 // pred_region
          _
        $region20: #{residual_critic_forward.1} parent=11 // pred_fallthru
          _
      $region12: #{residual_critic_forward.1} parent=5 // pred_fallthru
        _
      %p127 = scmp.lt.s32.totalorder %s12, 4
      // Predicated region
      $region21: #{residual_critic_forward.1} parent=5 // pred_check
        %p128 = pneg %p127
      $region22: #{residual_critic_forward.1} parent=5 // pred_check_branch
        %130 = sbr.rel (%p128) target = $region24
      $region23: #{residual_critic_forward.1} parent=5 // pred_region
        // Predicated region
        $region25: #{residual_critic_forward.1} parent=23 // pred_check
          %p131 = pneg %p32
        $region26: #{residual_critic_forward.1} parent=23 // pred_check_branch
          %133 = sbr.rel (%p131) target = $region28
        $region27: #{residual_critic_forward.1} parent=23 // pred_region
          %s134 = smul.u32 32, %s12
          %p135 = scmp.lt.s32.totalorder %s134, 127
          %s136 = scalar_select %p135, %s134, 127
          %s137 = smul.addr %s136, 8
          %s138 = scalar_lea.vmem %s0, %s137
          %s139 = smul.u32 32, %s12
        $region28: #{residual_critic_forward.1} parent=23 // pred_fallthru
          _
      $region24: #{residual_critic_forward.1} parent=5 // pred_fallthru
        _
      %p140 = scmp.le.s32.totalorder 1, %s12
      %p141 = scmp.lt.s32.totalorder %s12, 5
      %p142 = pnand %p140, %p141
      %p143 = pneg %p142
      // Predicated region
      $region29: #{residual_critic_forward.1} parent=5 // pred_check
        _
      $region30: #{residual_critic_forward.1} parent=5 // pred_check_branch
        %145 = sbr.rel (%p142) target = $region32
      $region31: #{residual_critic_forward.1} parent=5 // pred_region
        %s146 = ssub.s32 %s12, 1
        %s147 = smul.u32 32, %s17
        %p148 = scmp.lt.s32.totalorder %s147, 127
        %s149 = scalar_select %p148, %s147, 127
        %s150 = smul.addr %s149, 8
        %s151 = scalar_lea.vmem %s0, %s150
        %p152 = pneg %p38
        %p153 = pneg %p35
        %p154 = pneg %p59
        %p155 = pneg %p56
        %p156 = pneg %p80
        %p157 = pneg %p77
        %p158 = pneg %p106
        %p159 = pneg %p103
        %s160 = sand.u32 %s93, 1
        %s161 = scalar_lea.sflag [#allocation3], %s160
        %s162 = sand.u32 %s93, 1
        %s163 = smul.addr %s162, 2
        %s164 = scalar_lea.vmem [#allocation2], %s163
        %s165 = smul.u32 32, %s17
        %p166 = scmp.lt.s32.totalorder %s165, 127
        %s167 = scalar_select %p166, %s165, 127
        %s168 = smul.addr %s167, 8
        %s169 = scalar_lea.vmem %s0, %s168
        %s170 = smul.u32 32, %s17
        %s171 = smul.u32 2, %s17
        %v172 = vld [vmem:[%s169] sm:$0xff]
        %v173 = vld [vmem:[%s169 + $0x8] sm:$0xff]
        %v174 = vld [vmem:[%s169 + $0x10] sm:$0xff]
        %v175 = vld [vmem:[%s169 + $0x18] sm:$0xff]
        %v176 = vld [vmem:[%s169 + $0x20] sm:$0xff]
        %v177 = vld [vmem:[%s169 + $0x28] sm:$0xff]
        %v178 = vld [vmem:[%s169 + $0x30] sm:$0xff]
        %v179 = vld [vmem:[%s169 + $0x38] sm:$0xff]
        %v180 = vld [vmem:[%s169 + $0x40] sm:$0xff]
        %v181 = vld [vmem:[%s169 + $0x48] sm:$0xff]
        %v182 = vld [vmem:[%s169 + $0x50] sm:$0xff]
        %v183 = vld [vmem:[%s169 + $0x58] sm:$0xff]
        %v184 = vld [vmem:[%s169 + $0x60] sm:$0xff]
        %v185 = vld [vmem:[%s169 + $0x68] sm:$0xff]
        %v186 = vld [vmem:[%s169 + $0x70] sm:$0xff]
        %v187 = vld [vmem:[%s169 + $0x78] sm:$0xff]
        %v188 = vld [vmem:[%s169 + $0x80] sm:$0xff]
        %v189 = vld [vmem:[%s169 + $0x88] sm:$0xff]
        %v190 = vld [vmem:[%s169 + $0x90] sm:$0xff]
        %v191 = vld [vmem:[%s169 + $0x98] sm:$0xff]
        %v192 = vld [vmem:[%s169 + $0xa0] sm:$0xff]
        %v193 = vld [vmem:[%s169 + $0xa8] sm:$0xff]
        %v194 = vld [vmem:[%s169 + $0xb0] sm:$0xff]
        %v195 = vld [vmem:[%s169 + $0xb8] sm:$0xff]
        %v196 = vld [vmem:[%s169 + $0xc0] sm:$0xff]
        %v197 = vld [vmem:[%s169 + $0xc8] sm:$0xff]
        %v198 = vld [vmem:[%s169 + $0xd0] sm:$0xff]
        %v199 = vld [vmem:[%s169 + $0xd8] sm:$0xff]
        %v200 = vld [vmem:[%s169 + $0xe0] sm:$0xff]
        %v201 = vld [vmem:[%s169 + $0xe8] sm:$0xff]
        %v202 = vld [vmem:[%s169 + $0xf0] sm:$0xff]
        %v203 = vld [vmem:[%s169 + $0xf8] sm:$0xff]
        %v204 = vld [vmem:[%s1] sm:$0xff]
        %v205 = vld [vmem:[%s1 + $0x8] sm:$0xff]
        %v206 = vld [vmem:[%s1 + $0x10] sm:$0xff]
        %v207 = vld [vmem:[%s1 + $0x18] sm:$0xff]
        %s208 = scalar_lea.vmem %s1, 32
        %v209 = vld [vmem:[%s208] sm:$0xff]
        %v210 = vld [vmem:[%s208 + $0x8] sm:$0xff]
        %v211 = vld [vmem:[%s208 + $0x10] sm:$0xff]
        %v212 = vld [vmem:[%s208 + $0x18] sm:$0xff]
        %v213 = vld [vmem:[%s2] sm:$0x1]
        %v214 = vld [vmem:[%s2 + $0x1] sm:$0x1]
        %v215 = vld [vmem:[%s2 + $0x2] sm:$0x1]
        %v216 = vld [vmem:[%s2 + $0x3] sm:$0x1]
        %v217 = vlaneseq
        %v218 = vshrl.u32 %v217, 7
        %v219 = vsub.s32 0, %v218
        %v220 = vrot.slane %v213, %v219
        %vm221 = vcmask 261120
        %v223 = vsel %vm221, %v172, 0
        %v226 = vsel %vm221, %v173, 0
        %v229 = vsel %vm221, %v174, 0
        %v232 = vsel %vm221, %v175, 0
        %v235 = vsel %vm221, %v176, 0
        %v238 = vsel %vm221, %v177, 0
        %v241 = vsel %vm221, %v178, 0
        %v244 = vsel %vm221, %v179, 0
        %v247 = vsel %vm221, %v180, 0
        %v250 = vsel %vm221, %v181, 0
        %v253 = vsel %vm221, %v182, 0
        %v256 = vsel %vm221, %v183, 0
        %v259 = vsel %vm221, %v184, 0
        %v262 = vsel %vm221, %v185, 0
        %v265 = vsel %vm221, %v186, 0
        %v268 = vsel %vm221, %v187, 0
        %v271 = vsel %vm221, %v188, 0
        %v274 = vsel %vm221, %v189, 0
        %v277 = vsel %vm221, %v190, 0
        %v280 = vsel %vm221, %v191, 0
        %v283 = vsel %vm221, %v192, 0
        %v286 = vsel %vm221, %v193, 0
        %v289 = vsel %vm221, %v194, 0
        %v292 = vsel %vm221, %v195, 0
        %v295 = vsel %vm221, %v196, 0
        %v298 = vsel %vm221, %v197, 0
        %v301 = vsel %vm221, %v198, 0
        %v304 = vsel %vm221, %v199, 0
        %v307 = vsel %vm221, %v200, 0
        %v310 = vsel %vm221, %v201, 0
        %v313 = vsel %vm221, %v202, 0
        %v316 = vsel %vm221, %v203, 0
        %318 = vmatprep.subr.mxu0 0.0
        %319 = vmatpush1.msra.mxu0 0.0
        %320 = vmatprep.subr.mxu0 0.0
        %321 = vmatpush1.msra.mxu0 0.0
        %322 = vmatprep.subr.mxu0 0.0
        %323 = vmatpush1.msra.mxu0 0.0
        %324 = vmatprep.subr.mxu0 0.0
        %325 = vmatpush1.msra.mxu0 0.0
        %326 = vmatprep.subr.mxu0 0.0
        %327 = vmatpush1.msra.mxu0 0.0
        %328 = vmatprep.subr.mxu0 0.0
        %329 = vmatpush1.msra.mxu0 0.0
        %330 = vmatprep.subr.mxu0 0.0
        %331 = vmatpush1.msra.mxu0 0.0
        %332 = vmatprep.subr.mxu0 0.0
        %333 = vmatpush1.msra.mxu0 0.0
        %334 = vmatprep.subr.mxu0 0.0
        %335 = vmatpush1.msra.mxu0 0.0
        %336 = vmatprep.subr.mxu0 0.0
        %337 = vmatpush1.msra.mxu0 0.0
        %338 = vmatprep.subr.mxu0 0.0
        %339 = vmatpush1.msra.mxu0 0.0
        %340 = vmatprep.subr.mxu0 0.0
        %341 = vmatpush1.msra.mxu0 0.0
        %342 = vmatprep.subr.mxu0 0.0
        %343 = vmatpush1.msra.mxu0 %v207
        %344 = vmatprep.subr.mxu0 0.0
        %345 = vmatpush1.msra.mxu0 %v206
        %346 = vmatprep.subr.mxu0 0.0
        %347 = vmatpush1.msra.mxu0 %v205
        %348 = vmatprep.subr.mxu0 0.0
        %349 = vmatpush1.msra.mxu0 %v204
        %350 = vmatprep.subr.mxu0 0.0
        %351 = vmatpush2.msra.mxu0 0.0
        %352 = vmatprep.subr.mxu0 0.0
        %353 = vmatpush2.msra.mxu0 0.0
        %354 = vmatprep.subr.mxu0 0.0
        %355 = vmatpush2.msra.mxu0 0.0
        %356 = vmatprep.subr.mxu0 0.0
        %357 = vmatpush2.msra.mxu0 0.0
        %358 = vmatprep.subr.mxu0 0.0
        %359 = vmatpush2.msra.mxu0 0.0
        %360 = vmatprep.subr.mxu0 0.0
        %361 = vmatpush2.msra.mxu0 0.0
        %362 = vmatprep.subr.mxu0 0.0
        %363 = vmatpush2.msra.mxu0 0.0
        %364 = vmatprep.subr.mxu0 0.0
        %365 = vmatpush2.msra.mxu0 0.0
        %366 = vmatprep.subr.mxu0 0.0
        %367 = vmatpush2.msra.mxu0 0.0
        %368 = vmatprep.subr.mxu0 0.0
        %369 = vmatpush2.msra.mxu0 0.0
        %370 = vmatprep.subr.mxu0 0.0
        %371 = vmatpush2.msra.mxu0 0.0
        %372 = vmatprep.subr.mxu0 0.0
        %373 = vmatpush2.msra.mxu0 0.0
        %374 = vmatprep.subr.mxu0 0.0
        %375 = vmatpush2.msra.mxu0 0.0
        %376 = vmatprep.subr.mxu0 0.0
        %377 = vmatpush2.msra.mxu0 0.0
        %378 = vmatprep.subr.mxu0 0.0
        %379 = vmatpush2.msra.mxu0 0.0
        %380 = vmatprep.subr.mxu0 0.0
        %381 = vmatpush2.msra.mxu0 0.0
        %382 = vmatprep.mubr.f32.mxu0 0.0
        %383 = vmatmul.mubr.f32.gmra.mxu0 %v223
        %v384 = vpop.f32.mrf.mxu0
        %v385 = vadd.f32 %v220, %v384
        %v386 = vpop.f32.mrf.mxu0
        %387 = vmatprep.mubr.f32.mxu0 0.0
        %388 = vmatmul.mubr.f32.gmra.mxu0 %v226
        %v389 = vpop.f32.mrf.mxu0
        %v390 = vadd.f32 %v220, %v389
        %v391 = vpop.f32.mrf.mxu0
        %392 = vmatprep.mubr.f32.mxu0 0.0
        %393 = vmatmul.mubr.f32.gmra.mxu0 %v229
        %v394 = vpop.f32.mrf.mxu0
        %v395 = vadd.f32 %v220, %v394
        %v396 = vpop.f32.mrf.mxu0
        %397 = vmatprep.mubr.f32.mxu0 0.0
        %398 = vmatmul.mubr.f32.gmra.mxu0 %v232
        %v399 = vpop.f32.mrf.mxu0
        %v400 = vadd.f32 %v220, %v399
        %v401 = vpop.f32.mrf.mxu0
        %402 = vmatprep.mubr.f32.mxu0 0.0
        %403 = vmatmul.mubr.f32.gmra.mxu0 %v235
        %v404 = vpop.f32.mrf.mxu0
        %v405 = vadd.f32 %v220, %v404
        %v406 = vpop.f32.mrf.mxu0
        %407 = vmatprep.mubr.f32.mxu0 0.0
        %408 = vmatmul.mubr.f32.gmra.mxu0 %v238
        %v409 = vpop.f32.mrf.mxu0
        %v410 = vadd.f32 %v220, %v409
        %v411 = vpop.f32.mrf.mxu0
        %412 = vmatprep.mubr.f32.mxu0 0.0
        %413 = vmatmul.mubr.f32.gmra.mxu0 %v241
        %v414 = vpop.f32.mrf.mxu0
        %v415 = vadd.f32 %v220, %v414
        %v416 = vpop.f32.mrf.mxu0
        %417 = vmatprep.mubr.f32.mxu0 0.0
        %418 = vmatmul.mubr.f32.gmra.mxu0 %v244
        %v419 = vpop.f32.mrf.mxu0
        %v420 = vadd.f32 %v220, %v419
        %v421 = vpop.f32.mrf.mxu0
        %422 = vmatprep.mubr.f32.mxu0 0.0
        %423 = vmatmul.mubr.f32.gmra.mxu0 %v247
        %v424 = vpop.f32.mrf.mxu0
        %v425 = vadd.f32 %v220, %v424
        %v426 = vpop.f32.mrf.mxu0
        %427 = vmatprep.mubr.f32.mxu0 0.0
        %428 = vmatmul.mubr.f32.gmra.mxu0 %v250
        %v429 = vpop.f32.mrf.mxu0
        %v430 = vadd.f32 %v220, %v429
        %v431 = vpop.f32.mrf.mxu0
        %432 = vmatprep.mubr.f32.mxu0 0.0
        %433 = vmatmul.mubr.f32.gmra.mxu0 %v253
        %v434 = vpop.f32.mrf.mxu0
        %v435 = vadd.f32 %v220, %v434
        %v436 = vpop.f32.mrf.mxu0
        %437 = vmatprep.mubr.f32.mxu0 0.0
        %438 = vmatmul.mubr.f32.gmra.mxu0 %v256
        %v439 = vpop.f32.mrf.mxu0
        %v440 = vadd.f32 %v220, %v439
        %v441 = vpop.f32.mrf.mxu0
        %442 = vmatprep.mubr.f32.mxu0 0.0
        %443 = vmatmul.mubr.f32.gmra.mxu0 %v259
        %v444 = vpop.f32.mrf.mxu0
        %v445 = vadd.f32 %v220, %v444
        %v446 = vpop.f32.mrf.mxu0
        %447 = vmatprep.mubr.f32.mxu0 0.0
        %448 = vmatmul.mubr.f32.gmra.mxu0 %v262
        %v449 = vpop.f32.mrf.mxu0
        %v450 = vadd.f32 %v220, %v449
        %v451 = vpop.f32.mrf.mxu0
        %452 = vmatprep.mubr.f32.mxu0 0.0
        %453 = vmatmul.mubr.f32.gmra.mxu0 %v265
        %v454 = vpop.f32.mrf.mxu0
        %v455 = vadd.f32 %v220, %v454
        %v456 = vpop.f32.mrf.mxu0
        %457 = vmatprep.mubr.f32.mxu0 0.0
        %458 = vmatmul.mubr.f32.gmra.mxu0 %v268
        %v459 = vpop.f32.mrf.mxu0
        %v460 = vadd.f32 %v220, %v459
        %v461 = vpop.f32.mrf.mxu0
        %462 = vmatprep.mubr.f32.mxu0 0.0
        %463 = vmatmul.mubr.f32.gmra.mxu0 %v271
        %v464 = vpop.f32.mrf.mxu0
        %v465 = vadd.f32 %v220, %v464
        %v466 = vpop.f32.mrf.mxu0
        %467 = vmatprep.mubr.f32.mxu0 0.0
        %468 = vmatmul.mubr.f32.gmra.mxu0 %v274
        %v469 = vpop.f32.mrf.mxu0
        %v470 = vadd.f32 %v220, %v469
        %v471 = vpop.f32.mrf.mxu0
        %472 = vmatprep.mubr.f32.mxu0 0.0
        %473 = vmatmul.mubr.f32.gmra.mxu0 %v277
        %v474 = vpop.f32.mrf.mxu0
        %v475 = vadd.f32 %v220, %v474
        %v476 = vpop.f32.mrf.mxu0
        %477 = vmatprep.mubr.f32.mxu0 0.0
        %478 = vmatmul.mubr.f32.gmra.mxu0 %v280
        %v479 = vpop.f32.mrf.mxu0
        %v480 = vadd.f32 %v220, %v479
        %v481 = vpop.f32.mrf.mxu0
        %482 = vmatprep.mubr.f32.mxu0 0.0
        %483 = vmatmul.mubr.f32.gmra.mxu0 %v283
        %v484 = vpop.f32.mrf.mxu0
        %v485 = vadd.f32 %v220, %v484
        %v486 = vpop.f32.mrf.mxu0
        %487 = vmatprep.mubr.f32.mxu0 0.0
        %488 = vmatmul.mubr.f32.gmra.mxu0 %v286
        %v489 = vpop.f32.mrf.mxu0
        %v490 = vadd.f32 %v220, %v489
        %v491 = vpop.f32.mrf.mxu0
        %492 = vmatprep.mubr.f32.mxu0 0.0
        %493 = vmatmul.mubr.f32.gmra.mxu0 %v289
        %v494 = vpop.f32.mrf.mxu0
        %v495 = vadd.f32 %v220, %v494
        %v496 = vpop.f32.mrf.mxu0
        %497 = vmatprep.mubr.f32.mxu0 0.0
        %498 = vmatmul.mubr.f32.gmra.mxu0 %v292
        %v499 = vpop.f32.mrf.mxu0
        %v500 = vadd.f32 %v220, %v499
        %v501 = vpop.f32.mrf.mxu0
        %502 = vmatprep.mubr.f32.mxu0 0.0
        %503 = vmatmul.mubr.f32.gmra.mxu0 %v295
        %v504 = vpop.f32.mrf.mxu0
        %v505 = vadd.f32 %v220, %v504
        %v506 = vpop.f32.mrf.mxu0
        %507 = vmatprep.mubr.f32.mxu0 0.0
        %508 = vmatmul.mubr.f32.gmra.mxu0 %v298
        %v509 = vpop.f32.mrf.mxu0
        %v510 = vadd.f32 %v220, %v509
        %v511 = vpop.f32.mrf.mxu0
        %512 = vmatprep.mubr.f32.mxu0 0.0
        %513 = vmatmul.mubr.f32.gmra.mxu0 %v301
        %v514 = vpop.f32.mrf.mxu0
        %v515 = vadd.f32 %v220, %v514
        %v516 = vpop.f32.mrf.mxu0
        %517 = vmatprep.mubr.f32.mxu0 0.0
        %518 = vmatmul.mubr.f32.gmra.mxu0 %v304
        %v519 = vpop.f32.mrf.mxu0
        %v520 = vadd.f32 %v220, %v519
        %v521 = vpop.f32.mrf.mxu0
        %522 = vmatprep.mubr.f32.mxu0 0.0
        %523 = vmatmul.mubr.f32.gmra.mxu0 %v307
        %v524 = vpop.f32.mrf.mxu0
        %v525 = vadd.f32 %v220, %v524
        %v526 = vpop.f32.mrf.mxu0
        %527 = vmatprep.mubr.f32.mxu0 0.0
        %528 = vmatmul.mubr.f32.gmra.mxu0 %v310
        %v529 = vpop.f32.mrf.mxu0
        %v530 = vadd.f32 %v220, %v529
        %v531 = vpop.f32.mrf.mxu0
        %532 = vmatprep.mubr.f32.mxu0 0.0
        %533 = vmatmul.mubr.f32.gmra.mxu0 %v313
        %v534 = vpop.f32.mrf.mxu0
        %v535 = vadd.f32 %v220, %v534
        %v536 = vpop.f32.mrf.mxu0
        %537 = vmatprep.mubr.f32.mxu0 0.0
        %538 = vmatmul.mubr.f32.gmra.mxu0 %v316
        %v539 = vpop.f32.mrf.mxu0
        %v540 = vadd.f32 %v220, %v539
        %v541 = vpop.f32.mrf.mxu0
        %542 = vdwg.mxu0
        %v543 = vmax.f32 %v385, 0.0
        %v544 = vmax.f32 %v390, 0.0
        %v545 = vmax.f32 %v395, 0.0
        %v546 = vmax.f32 %v400, 0.0
        %v547 = vmax.f32 %v405, 0.0
        %v548 = vmax.f32 %v410, 0.0
        %v549 = vmax.f32 %v415, 0.0
        %v550 = vmax.f32 %v420, 0.0
        %v551 = vmax.f32 %v425, 0.0
        %v552 = vmax.f32 %v430, 0.0
        %v553 = vmax.f32 %v435, 0.0
        %v554 = vmax.f32 %v440, 0.0
        %v555 = vmax.f32 %v445, 0.0
        %v556 = vmax.f32 %v450, 0.0
        %v557 = vmax.f32 %v455, 0.0
        %v558 = vmax.f32 %v460, 0.0
        %v559 = vmax.f32 %v465, 0.0
        %v560 = vmax.f32 %v470, 0.0
        %v561 = vmax.f32 %v475, 0.0
        %v562 = vmax.f32 %v480, 0.0
        %v563 = vmax.f32 %v485, 0.0
        %v564 = vmax.f32 %v490, 0.0
        %v565 = vmax.f32 %v495, 0.0
        %v566 = vmax.f32 %v500, 0.0
        %v567 = vmax.f32 %v505, 0.0
        %v568 = vmax.f32 %v510, 0.0
        %v569 = vmax.f32 %v515, 0.0
        %v570 = vmax.f32 %v520, 0.0
        %v571 = vmax.f32 %v525, 0.0
        %v572 = vmax.f32 %v530, 0.0
        %v573 = vmax.f32 %v535, 0.0
        %v574 = vmax.f32 %v540, 0.0
        %v575 = vlaneseq
        %v576 = vshrl.u32 %v575, 7
        %v577 = vsub.s32 0, %v576
        %v578 = vrot.slane %v214, %v577
        %v580 = vsel %vm221, %v543, 0
        %v583 = vsel %vm221, %v544, 0
        %v586 = vsel %vm221, %v545, 0
        %v589 = vsel %vm221, %v546, 0
        %v592 = vsel %vm221, %v547, 0
        %v595 = vsel %vm221, %v548, 0
        %v598 = vsel %vm221, %v549, 0
        %v601 = vsel %vm221, %v550, 0
        %v604 = vsel %vm221, %v551, 0
        %v607 = vsel %vm221, %v552, 0
        %v610 = vsel %vm221, %v553, 0
        %v613 = vsel %vm221, %v554, 0
        %v616 = vsel %vm221, %v555, 0
        %v619 = vsel %vm221, %v556, 0
        %v622 = vsel %vm221, %v557, 0
        %v625 = vsel %vm221, %v558, 0
        %v628 = vsel %vm221, %v559, 0
        %v631 = vsel %vm221, %v560, 0
        %v634 = vsel %vm221, %v561, 0
        %v637 = vsel %vm221, %v562, 0
        %v640 = vsel %vm221, %v563, 0
        %v643 = vsel %vm221, %v564, 0
        %v646 = vsel %vm221, %v565, 0
        %v649 = vsel %vm221, %v566, 0
        %v652 = vsel %vm221, %v567, 0
        %v655 = vsel %vm221, %v568, 0
        %v658 = vsel %vm221, %v569, 0
        %v661 = vsel %vm221, %v570, 0
        %v664 = vsel %vm221, %v571, 0
        %v667 = vsel %vm221, %v572, 0
        %v670 = vsel %vm221, %v573, 0
        %v673 = vsel %vm221, %v574, 0
        %675 = vmatprep.subr.mxu0 0.0
        %676 = vmatpush1.msra.mxu0 0.0
        %677 = vmatprep.subr.mxu0 0.0
        %678 = vmatpush1.msra.mxu0 0.0
        %679 = vmatprep.subr.mxu0 0.0
        %680 = vmatpush1.msra.mxu0 0.0
        %681 = vmatprep.subr.mxu0 0.0
        %682 = vmatpush1.msra.mxu0 0.0
        %683 = vmatprep.subr.mxu0 0.0
        %684 = vmatpush1.msra.mxu0 0.0
        %685 = vmatprep.subr.mxu0 0.0
        %686 = vmatpush1.msra.mxu0 0.0
        %687 = vmatprep.subr.mxu0 0.0
        %688 = vmatpush1.msra.mxu0 0.0
        %689 = vmatprep.subr.mxu0 0.0
        %690 = vmatpush1.msra.mxu0 0.0
        %691 = vmatprep.subr.mxu0 0.0
        %692 = vmatpush1.msra.mxu0 0.0
        %693 = vmatprep.subr.mxu0 0.0
        %694 = vmatpush1.msra.mxu0 0.0
        %695 = vmatprep.subr.mxu0 0.0
        %696 = vmatpush1.msra.mxu0 0.0
        %697 = vmatprep.subr.mxu0 0.0
        %698 = vmatpush1.msra.mxu0 0.0
        %699 = vmatprep.subr.mxu0 0.0
        %700 = vmatpush1.msra.mxu0 %v212
        %701 = vmatprep.subr.mxu0 0.0
        %702 = vmatpush1.msra.mxu0 %v211
        %703 = vmatprep.subr.mxu0 0.0
        %704 = vmatpush1.msra.mxu0 %v210
        %705 = vmatprep.subr.mxu0 0.0
        %706 = vmatpush1.msra.mxu0 %v209
        %707 = vmatprep.subr.mxu0 0.0
        %708 = vmatpush2.msra.mxu0 0.0
        %709 = vmatprep.subr.mxu0 0.0
        %710 = vmatpush2.msra.mxu0 0.0
        %711 = vmatprep.subr.mxu0 0.0
        %712 = vmatpush2.msra.mxu0 0.0
        %713 = vmatprep.subr.mxu0 0.0
        %714 = vmatpush2.msra.mxu0 0.0
        %715 = vmatprep.subr.mxu0 0.0
        %716 = vmatpush2.msra.mxu0 0.0
        %717 = vmatprep.subr.mxu0 0.0
        %718 = vmatpush2.msra.mxu0 0.0
        %719 = vmatprep.subr.mxu0 0.0
        %720 = vmatpush2.msra.mxu0 0.0
        %721 = vmatprep.subr.mxu0 0.0
        %722 = vmatpush2.msra.mxu0 0.0
        %723 = vmatprep.subr.mxu0 0.0
        %724 = vmatpush2.msra.mxu0 0.0
        %725 = vmatprep.subr.mxu0 0.0
        %726 = vmatpush2.msra.mxu0 0.0
        %727 = vmatprep.subr.mxu0 0.0
        %728 = vmatpush2.msra.mxu0 0.0
        %729 = vmatprep.subr.mxu0 0.0
        %730 = vmatpush2.msra.mxu0 0.0
        %731 = vmatprep.subr.mxu0 0.0
        %732 = vmatpush2.msra.mxu0 0.0
        %733 = vmatprep.subr.mxu0 0.0
        %734 = vmatpush2.msra.mxu0 0.0
        %735 = vmatprep.subr.mxu0 0.0
        %736 = vmatpush2.msra.mxu0 0.0
        %737 = vmatprep.subr.mxu0 0.0
        %738 = vmatpush2.msra.mxu0 0.0
        %739 = vmatprep.mubr.f32.mxu0 0.0
        %740 = vmatmul.mubr.f32.gmra.mxu0 %v580
        %v741 = vpop.f32.mrf.mxu0
        %v742 = vadd.f32 %v578, %v741
        %v743 = vpop.f32.mrf.mxu0
        %744 = vmatprep.mubr.f32.mxu0 0.0
        %745 = vmatmul.mubr.f32.gmra.mxu0 %v583
        %v746 = vpop.f32.mrf.mxu0
        %v747 = vadd.f32 %v578, %v746
        %v748 = vpop.f32.mrf.mxu0
        %749 = vmatprep.mubr.f32.mxu0 0.0
        %750 = vmatmul.mubr.f32.gmra.mxu0 %v586
        %v751 = vpop.f32.mrf.mxu0
        %v752 = vadd.f32 %v578, %v751
        %v753 = vpop.f32.mrf.mxu0
        %754 = vmatprep.mubr.f32.mxu0 0.0
        %755 = vmatmul.mubr.f32.gmra.mxu0 %v589
        %v756 = vpop.f32.mrf.mxu0
        %v757 = vadd.f32 %v578, %v756
        %v758 = vpop.f32.mrf.mxu0
        %759 = vmatprep.mubr.f32.mxu0 0.0
        %760 = vmatmul.mubr.f32.gmra.mxu0 %v592
        %v761 = vpop.f32.mrf.mxu0
        %v762 = vadd.f32 %v578, %v761
        %v763 = vpop.f32.mrf.mxu0
        %764 = vmatprep.mubr.f32.mxu0 0.0
        %765 = vmatmul.mubr.f32.gmra.mxu0 %v595
        %v766 = vpop.f32.mrf.mxu0
        %v767 = vadd.f32 %v578, %v766
        %v768 = vpop.f32.mrf.mxu0
        %769 = vmatprep.mubr.f32.mxu0 0.0
        %770 = vmatmul.mubr.f32.gmra.mxu0 %v598
        %v771 = vpop.f32.mrf.mxu0
        %v772 = vadd.f32 %v578, %v771
        %v773 = vpop.f32.mrf.mxu0
        %774 = vmatprep.mubr.f32.mxu0 0.0
        %775 = vmatmul.mubr.f32.gmra.mxu0 %v601
        %v776 = vpop.f32.mrf.mxu0
        %v777 = vadd.f32 %v578, %v776
        %v778 = vpop.f32.mrf.mxu0
        %779 = vmatprep.mubr.f32.mxu0 0.0
        %780 = vmatmul.mubr.f32.gmra.mxu0 %v604
        %v781 = vpop.f32.mrf.mxu0
        %v782 = vadd.f32 %v578, %v781
        %v783 = vpop.f32.mrf.mxu0
        %784 = vmatprep.mubr.f32.mxu0 0.0
        %785 = vmatmul.mubr.f32.gmra.mxu0 %v607
        %v786 = vpop.f32.mrf.mxu0
        %v787 = vadd.f32 %v578, %v786
        %v788 = vpop.f32.mrf.mxu0
        %789 = vmatprep.mubr.f32.mxu0 0.0
        %790 = vmatmul.mubr.f32.gmra.mxu0 %v610
        %v791 = vpop.f32.mrf.mxu0
        %v792 = vadd.f32 %v578, %v791
        %v793 = vpop.f32.mrf.mxu0
        %794 = vmatprep.mubr.f32.mxu0 0.0
        %795 = vmatmul.mubr.f32.gmra.mxu0 %v613
        %v796 = vpop.f32.mrf.mxu0
        %v797 = vadd.f32 %v578, %v796
        %v798 = vpop.f32.mrf.mxu0
        %799 = vmatprep.mubr.f32.mxu0 0.0
        %800 = vmatmul.mubr.f32.gmra.mxu0 %v616
        %v801 = vpop.f32.mrf.mxu0
        %v802 = vadd.f32 %v578, %v801
        %v803 = vpop.f32.mrf.mxu0
        %804 = vmatprep.mubr.f32.mxu0 0.0
        %805 = vmatmul.mubr.f32.gmra.mxu0 %v619
        %v806 = vpop.f32.mrf.mxu0
        %v807 = vadd.f32 %v578, %v806
        %v808 = vpop.f32.mrf.mxu0
        %809 = vmatprep.mubr.f32.mxu0 0.0
        %810 = vmatmul.mubr.f32.gmra.mxu0 %v622
        %v811 = vpop.f32.mrf.mxu0
        %v812 = vadd.f32 %v578, %v811
        %v813 = vpop.f32.mrf.mxu0
        %814 = vmatprep.mubr.f32.mxu0 0.0
        %815 = vmatmul.mubr.f32.gmra.mxu0 %v625
        %v816 = vpop.f32.mrf.mxu0
        %v817 = vadd.f32 %v578, %v816
        %v818 = vpop.f32.mrf.mxu0
        %819 = vmatprep.mubr.f32.mxu0 0.0
        %820 = vmatmul.mubr.f32.gmra.mxu0 %v628
        %v821 = vpop.f32.mrf.mxu0
        %v822 = vadd.f32 %v578, %v821
        %v823 = vpop.f32.mrf.mxu0
        %824 = vmatprep.mubr.f32.mxu0 0.0
        %825 = vmatmul.mubr.f32.gmra.mxu0 %v631
        %v826 = vpop.f32.mrf.mxu0
        %v827 = vadd.f32 %v578, %v826
        %v828 = vpop.f32.mrf.mxu0
        %829 = vmatprep.mubr.f32.mxu0 0.0
        %830 = vmatmul.mubr.f32.gmra.mxu0 %v634
        %v831 = vpop.f32.mrf.mxu0
        %v832 = vadd.f32 %v578, %v831
        %v833 = vpop.f32.mrf.mxu0
        %834 = vmatprep.mubr.f32.mxu0 0.0
        %835 = vmatmul.mubr.f32.gmra.mxu0 %v637
        %v836 = vpop.f32.mrf.mxu0
        %v837 = vadd.f32 %v578, %v836
        %v838 = vpop.f32.mrf.mxu0
        %839 = vmatprep.mubr.f32.mxu0 0.0
        %840 = vmatmul.mubr.f32.gmra.mxu0 %v640
        %v841 = vpop.f32.mrf.mxu0
        %v842 = vadd.f32 %v578, %v841
        %v843 = vpop.f32.mrf.mxu0
        %844 = vmatprep.mubr.f32.mxu0 0.0
        %845 = vmatmul.mubr.f32.gmra.mxu0 %v643
        %v846 = vpop.f32.mrf.mxu0
        %v847 = vadd.f32 %v578, %v846
        %v848 = vpop.f32.mrf.mxu0
        %849 = vmatprep.mubr.f32.mxu0 0.0
        %850 = vmatmul.mubr.f32.gmra.mxu0 %v646
        %v851 = vpop.f32.mrf.mxu0
        %v852 = vadd.f32 %v578, %v851
        %v853 = vpop.f32.mrf.mxu0
        %854 = vmatprep.mubr.f32.mxu0 0.0
        %855 = vmatmul.mubr.f32.gmra.mxu0 %v649
        %v856 = vpop.f32.mrf.mxu0
        %v857 = vadd.f32 %v578, %v856
        %v858 = vpop.f32.mrf.mxu0
        %859 = vmatprep.mubr.f32.mxu0 0.0
        %860 = vmatmul.mubr.f32.gmra.mxu0 %v652
        %v861 = vpop.f32.mrf.mxu0
        %v862 = vadd.f32 %v578, %v861
        %v863 = vpop.f32.mrf.mxu0
        %864 = vmatprep.mubr.f32.mxu0 0.0
        %865 = vmatmul.mubr.f32.gmra.mxu0 %v655
        %v866 = vpop.f32.mrf.mxu0
        %v867 = vadd.f32 %v578, %v866
        %v868 = vpop.f32.mrf.mxu0
        %869 = vmatprep.mubr.f32.mxu0 0.0
        %870 = vmatmul.mubr.f32.gmra.mxu0 %v658
        %v871 = vpop.f32.mrf.mxu0
        %v872 = vadd.f32 %v578, %v871
        %v873 = vpop.f32.mrf.mxu0
        %874 = vmatprep.mubr.f32.mxu0 0.0
        %875 = vmatmul.mubr.f32.gmra.mxu0 %v661
        %v876 = vpop.f32.mrf.mxu0
        %v877 = vadd.f32 %v578, %v876
        %v878 = vpop.f32.mrf.mxu0
        %879 = vmatprep.mubr.f32.mxu0 0.0
        %880 = vmatmul.mubr.f32.gmra.mxu0 %v664
        %v881 = vpop.f32.mrf.mxu0
        %v882 = vadd.f32 %v578, %v881
        %v883 = vpop.f32.mrf.mxu0
        %884 = vmatprep.mubr.f32.mxu0 0.0
        %885 = vmatmul.mubr.f32.gmra.mxu0 %v667
        %v886 = vpop.f32.mrf.mxu0
        %v887 = vadd.f32 %v578, %v886
        %v888 = vpop.f32.mrf.mxu0
        %889 = vmatprep.mubr.f32.mxu0 0.0
        %890 = vmatmul.mubr.f32.gmra.mxu0 %v670
        %v891 = vpop.f32.mrf.mxu0
        %v892 = vadd.f32 %v578, %v891
        %v893 = vpop.f32.mrf.mxu0
        %894 = vmatprep.mubr.f32.mxu0 0.0
        %895 = vmatmul.mubr.f32.gmra.mxu0 %v673
        %v896 = vpop.f32.mrf.mxu0
        %v897 = vadd.f32 %v578, %v896
        %v898 = vpop.f32.mrf.mxu0
        %899 = vdwg.mxu0
        %v900 = vadd.f32 %v742, %v172
        %v901 = vadd.f32 %v747, %v173
        %v902 = vadd.f32 %v752, %v174
        %v903 = vadd.f32 %v757, %v175
        %v904 = vadd.f32 %v762, %v176
        %v905 = vadd.f32 %v767, %v177
        %v906 = vadd.f32 %v772, %v178
        %v907 = vadd.f32 %v777, %v179
        %v908 = vadd.f32 %v782, %v180
        %v909 = vadd.f32 %v787, %v181
        %v910 = vadd.f32 %v792, %v182
        %v911 = vadd.f32 %v797, %v183
        %v912 = vadd.f32 %v802, %v184
        %v913 = vadd.f32 %v807, %v185
        %v914 = vadd.f32 %v812, %v186
        %v915 = vadd.f32 %v817, %v187
        %v916 = vadd.f32 %v822, %v188
        %v917 = vadd.f32 %v827, %v189
        %v918 = vadd.f32 %v832, %v190
        %v919 = vadd.f32 %v837, %v191
        %v920 = vadd.f32 %v842, %v192
        %v921 = vadd.f32 %v847, %v193
        %v922 = vadd.f32 %v852, %v194
        %v923 = vadd.f32 %v857, %v195
        %v924 = vadd.f32 %v862, %v196
        %v925 = vadd.f32 %v867, %v197
        %v926 = vadd.f32 %v872, %v198
        %v927 = vadd.f32 %v877, %v199
        %v928 = vadd.f32 %v882, %v200
        %v929 = vadd.f32 %v887, %v201
        %v930 = vadd.f32 %v892, %v202
        %v931 = vadd.f32 %v897, %v203
        %v932 = vmax.f32 %v900, 0.0
        %v933 = vmax.f32 %v901, 0.0
        %v934 = vmax.f32 %v902, 0.0
        %v935 = vmax.f32 %v903, 0.0
        %v936 = vmax.f32 %v904, 0.0
        %v937 = vmax.f32 %v905, 0.0
        %v938 = vmax.f32 %v906, 0.0
        %v939 = vmax.f32 %v907, 0.0
        %v940 = vmax.f32 %v908, 0.0
        %v941 = vmax.f32 %v909, 0.0
        %v942 = vmax.f32 %v910, 0.0
        %v943 = vmax.f32 %v911, 0.0
        %v944 = vmax.f32 %v912, 0.0
        %v945 = vmax.f32 %v913, 0.0
        %v946 = vmax.f32 %v914, 0.0
        %v947 = vmax.f32 %v915, 0.0
        %v948 = vmax.f32 %v916, 0.0
        %v949 = vmax.f32 %v917, 0.0
        %v950 = vmax.f32 %v918, 0.0
        %v951 = vmax.f32 %v919, 0.0
        %v952 = vmax.f32 %v920, 0.0
        %v953 = vmax.f32 %v921, 0.0
        %v954 = vmax.f32 %v922, 0.0
        %v955 = vmax.f32 %v923, 0.0
        %v956 = vmax.f32 %v924, 0.0
        %v957 = vmax.f32 %v925, 0.0
        %v958 = vmax.f32 %v926, 0.0
        %v959 = vmax.f32 %v927, 0.0
        %v960 = vmax.f32 %v928, 0.0
        %v961 = vmax.f32 %v929, 0.0
        %v962 = vmax.f32 %v930, 0.0
        %v963 = vmax.f32 %v931, 0.0
        %965 = vset.pattern.permute.xlu0 0
        %966 = vperm.xlu0 %965, %v216
        %v967 = vpop.permute.xlu0 %966
        %v970 = vsel %vm221, %v215, 0
        %v973 = vsel %vm221, %v932, 0
        %v976 = vsel %vm221, %v933, 0
        %v979 = vsel %vm221, %v934, 0
        %v982 = vsel %vm221, %v935, 0
        %v985 = vsel %vm221, %v936, 0
        %v988 = vsel %vm221, %v937, 0
        %v991 = vsel %vm221, %v938, 0
        %v994 = vsel %vm221, %v939, 0
        %v997 = vsel %vm221, %v940, 0
        %v1000 = vsel %vm221, %v941, 0
        %v1003 = vsel %vm221, %v942, 0
        %v1006 = vsel %vm221, %v943, 0
        %v1009 = vsel %vm221, %v944, 0
        %v1012 = vsel %vm221, %v945, 0
        %v1015 = vsel %vm221, %v946, 0
        %v1018 = vsel %vm221, %v947, 0
        %v1021 = vsel %vm221, %v948, 0
        %v1024 = vsel %vm221, %v949, 0
        %v1027 = vsel %vm221, %v950, 0
        %v1030 = vsel %vm221, %v951, 0
        %v1033 = vsel %vm221, %v952, 0
        %v1036 = vsel %vm221, %v953, 0
        %v1039 = vsel %vm221, %v954, 0
        %v1042 = vsel %vm221, %v955, 0
        %v1045 = vsel %vm221, %v956, 0
        %v1048 = vsel %vm221, %v957, 0
        %v1051 = vsel %vm221, %v958, 0
        %v1054 = vsel %vm221, %v959, 0
        %v1057 = vsel %vm221, %v960, 0
        %v1060 = vsel %vm221, %v961, 0
        %v1063 = vsel %vm221, %v962, 0
        %v1066 = vsel %vm221, %v963, 0
        %1068 = vmatprep.subr.mxu0 0.0
        %1069 = vmatpush1.xpose.msra.mxu0 %v1018
        %1070 = vmatprep.subr.mxu0 0.0
        %1071 = vmatpush1.xpose.msra.mxu0 %v1015
        %1072 = vmatprep.subr.mxu0 0.0
        %1073 = vmatpush1.xpose.msra.mxu0 %v1012
        %1074 = vmatprep.subr.mxu0 0.0
        %1075 = vmatpush1.xpose.msra.mxu0 %v1009
        %1076 = vmatprep.subr.mxu0 0.0
        %1077 = vmatpush1.xpose.msra.mxu0 %v1006
        %1078 = vmatprep.subr.mxu0 0.0
        %1079 = vmatpush1.xpose.msra.mxu0 %v1003
        %1080 = vmatprep.subr.mxu0 0.0
        %1081 = vmatpush1.xpose.msra.mxu0 %v1000
        %1082 = vmatprep.subr.mxu0 0.0
        %1083 = vmatpush1.xpose.msra.mxu0 %v997
        %1084 = vmatprep.subr.mxu0 0.0
        %1085 = vmatpush1.xpose.msra.mxu0 %v994
        %1086 = vmatprep.subr.mxu0 0.0
        %1087 = vmatpush1.xpose.msra.mxu0 %v991
        %1088 = vmatprep.subr.mxu0 0.0
        %1089 = vmatpush1.xpose.msra.mxu0 %v988
        %1090 = vmatprep.subr.mxu0 0.0
        %1091 = vmatpush1.xpose.msra.mxu0 %v985
        %1092 = vmatprep.subr.mxu0 0.0
        %1093 = vmatpush1.xpose.msra.mxu0 %v982
        %1094 = vmatprep.subr.mxu0 0.0
        %1095 = vmatpush1.xpose.msra.mxu0 %v979
        %1096 = vmatprep.subr.mxu0 0.0
        %1097 = vmatpush1.xpose.msra.mxu0 %v976
        %1098 = vmatprep.subr.mxu0 0.0
        %1099 = vmatpush1.xpose.msra.mxu0 %v973
        %1100 = vmatprep.subr.mxu0 0.0
        %1101 = vmatpush2.xpose.msra.mxu0 %v1066
        %1102 = vmatprep.subr.mxu0 0.0
        %1103 = vmatpush2.xpose.msra.mxu0 %v1063
        %1104 = vmatprep.subr.mxu0 0.0
        %1105 = vmatpush2.xpose.msra.mxu0 %v1060
        %1106 = vmatprep.subr.mxu0 0.0
        %1107 = vmatpush2.xpose.msra.mxu0 %v1057
        %1108 = vmatprep.subr.mxu0 0.0
        %1109 = vmatpush2.xpose.msra.mxu0 %v1054
        %1110 = vmatprep.subr.mxu0 0.0
        %1111 = vmatpush2.xpose.msra.mxu0 %v1051
        %1112 = vmatprep.subr.mxu0 0.0
        %1113 = vmatpush2.xpose.msra.mxu0 %v1048
        %1114 = vmatprep.subr.mxu0 0.0
        %1115 = vmatpush2.xpose.msra.mxu0 %v1045
        %1116 = vmatprep.subr.mxu0 0.0
        %1117 = vmatpush2.xpose.msra.mxu0 %v1042
        %1118 = vmatprep.subr.mxu0 0.0
        %1119 = vmatpush2.xpose.msra.mxu0 %v1039
        %1120 = vmatprep.subr.mxu0 0.0
        %1121 = vmatpush2.xpose.msra.mxu0 %v1036
        %1122 = vmatprep.subr.mxu0 0.0
        %1123 = vmatpush2.xpose.msra.mxu0 %v1033
        %1124 = vmatprep.subr.mxu0 0.0
        %1125 = vmatpush2.xpose.msra.mxu0 %v1030
        %1126 = vmatprep.subr.mxu0 0.0
        %1127 = vmatpush2.xpose.msra.mxu0 %v1027
        %1128 = vmatprep.subr.mxu0 0.0
        %1129 = vmatpush2.xpose.msra.mxu0 %v1024
        %1130 = vmatprep.subr.mxu0 0.0
        %1131 = vmatpush2.xpose.msra.mxu0 %v1021
        %1132 = vmatprep.mubr.f32.mxu0 0.0
        %1133 = vmatmul.mubr.f32.gmra.mxu0 %v970
        %v1134 = vpop.f32.mrf.mxu0
        %v1135 = vadd.f32 %v967, %v1134
        %v1136 = vpop.f32.mrf.mxu0
        %v1137 = vadd.f32 %v967, %v1136
        %1138 = vdwg.mxu0
        %v1141 = vcombine.low %v1135, %v1137
        %v1143 = vunpack.c.l.s4 1966171168
        %v1144 = vunpack.c.0.s8 %v1143
        %v1145 = vlaneseq
        %v1146 = vshrl.u32 %v1145, 7
        %v1147 = vsub.s32 %v1144, %v1146
        %v1148 = vrot.slane %v1141, %v1147
        %v1150 = vunpack.c.l.s4 1966171168
        %v1151 = vunpack.c.0.s8 %v1150
        %v1152 = vlaneseq
        %v1153 = vshrl.u32 %v1152, 7
        %v1154 = vsub.s32 %v1151, %v1153
        %v1155 = vrot.slane %v1148, %v1154
        %v1157 = vlaneseq
        %vm1158 = vcmp.ge.s32.totalorder %v1157, 0
        %vm1159 = vcmp.lt.s32.totalorder %v1157, 256
        %vm1160 = vmand %vm1158, %vm1159
        %1161 = vst.msk [vmem:[%s164] sm:$0x3] %vm1160, %v1155
        %s1162 = sand.u32 %s93, 1
        %s1163 = scalar_lea.sflag [#allocation3], %s1162
        %s1164 = sand.u32 %s93, 1
        %s1165 = smul.addr %s1164, 2
        %s1166 = scalar_lea.vmem [#allocation2], %s1165
        // Predicated region
        $region33: #{residual_critic_forward.1} parent=31 // pred_check
          %p1167 = pneg %p103
        $region34: #{residual_critic_forward.1} parent=31 // pred_check_branch
          %1169 = sbr.rel (%p1167) target = $region36
        $region35: #{residual_critic_forward.1} parent=31 // pred_region
          %s1170 = smul.u32 2, %s17
          %s1172 = ssub.s32 32, 32
          %1173 = vsyncadd %s1163, %s1172
          %s1174 = smul.addr %s1170, 16
          %s1175 = scalar_lea.hbm %s3, %s1174
          %s1177 = sshll.u32 %s1166, 4
          %s1178 = int_to_ptr.vmem [resolvable:$true] %s1177
          %1180 = dma.vmem_to_hbm [thread:$0]  %s1178, 32, %s1175, %s1163
        $region36: #{residual_critic_forward.1} parent=31 // pred_fallthru
          _
      $region32: #{residual_critic_forward.1} parent=5 // pred_fallthru
        _
      %p1181 = scmp.le.s32.totalorder 2, %s12
      // Predicated region
      $region37: #{residual_critic_forward.1} parent=5 // pred_check
        %p1182 = pneg %p1181
      $region38: #{residual_critic_forward.1} parent=5 // pred_check_branch
        %1184 = sbr.rel (%p1182) target = $region40
      $region39: #{residual_critic_forward.1} parent=5 // pred_region
        %s1185 = ssub.s32 %s12, 2
        // Predicated region
        $region41: #{residual_critic_forward.1} parent=39 // pred_check
          %p1186 = pneg %p109
        $region42: #{residual_critic_forward.1} parent=39 // pred_check_branch
          %1188 = sbr.rel (%p1186) target = $region44
        $region43: #{residual_critic_forward.1} parent=39 // pred_region
          %s1189 = sand.u32 %s94, 1
          %s1190 = scalar_lea.sflag [#allocation3], %s1189
          %s1191 = sand.u32 %s94, 1
          %s1192 = smul.addr %s1191, 2
          %s1193 = scalar_lea.vmem [#allocation2], %s1192
          %1194 = dma.done %s1190, 32
        $region44: #{residual_critic_forward.1} parent=39 // pred_fallthru
          _
      $region40: #{residual_critic_forward.1} parent=5 // pred_fallthru
        _
    $region6: #{residual_critic_forward.1} parent=1 // loop_footer
      %s16 = sadd.s32 1, %s12
    $region7: #{residual_critic_forward.1} parent=1 // loop_footer_branch
      %11 = sbr.rel target = $region3
    $region8: #{residual_critic_forward.1} parent=1 // loop_exit
      _
    %1195 = vsyncpa [#allocation3], 1
    %s1196 = scalar_lea.sflag [#allocation3], 1
    %1197 = vsyncpa %s1196, 1

</llo_original>
